<compile_context>
chip_gen: v6e
topology: v6e:2x2x1
jax: 0.10.0
libtpu: 0.0.40
codegen_flags: <defaults>
</compile_context>

<pallas_src>
import jax
import jax.numpy as jnp
from jax.experimental import pallas as pl
from jax.experimental.pallas import tpu as pltpu


def _laplace_density_kernel(params_ref, sdf_ref, out_ref):
    # params_ref (SMEM): [inv_beta, half_alpha, alpha]
    inv_beta = params_ref[0, 0]
    half_alpha = params_ref[0, 1]
    alpha = params_ref[0, 2]

    s = sdf_ref[...].astype(jnp.float32)
    e = jnp.exp(-jnp.abs(s) * inv_beta)            # EUP exp, VPU mul
    # s >= 0:  alpha*(0.5 + 0.5*(e-1)) = 0.5*alpha*e
    # s <  0:  alpha*(0.5 - 0.5*(e-1)) = alpha - 0.5*alpha*e
    out = jnp.where(s >= 0, half_alpha * e, alpha - half_alpha * e)
    out_ref[...] = out.astype(out_ref.dtype)


def laplace_density(sdf, beta_param, beta_min=1e-4, beta=None):
    """Forward pass of Density (LaplaceDensity variant).

    sdf:        jnp array of any shape (float dtype)
    beta_param: learnable scalar parameter
    beta:       optional explicit beta override (mirrors forward(sdf, beta=None);
                the override path does NOT add beta_min, matching PyTorch).
    """
    if beta is None:
        beta_val = jnp.abs(jnp.asarray(beta_param, jnp.float32)) + beta_min
    else:
        beta_val = jnp.asarray(beta, jnp.float32)
    inv_beta = 1.0 / beta_val                      # alpha = 1/beta
    alpha = inv_beta
    half_alpha = 0.5 * alpha
    params = jnp.stack([inv_beta, half_alpha, alpha]).reshape(1, 3)

    orig_shape = sdf.shape
    orig_dtype = sdf.dtype
    flat = sdf.reshape(-1)
    n = flat.shape[0]

    # Pick the widest lane-dense last dim that divides n (no padding copy);
    # otherwise pad only up to the next multiple of 128.
    lane_w = None
    for w in (1024, 512, 256, 128):
        if n % w == 0:
            lane_w = w
            break
    if lane_w is None:
        lane_w = 128
        pad = (-n) % lane_w
        flat = jnp.pad(flat, (0, pad))
    else:
        pad = 0

    rows = flat.shape[0] // lane_w
    slab = flat.reshape(rows, lane_w)

    # ~1 MiB (f32) per input block; double-buffered in+out ~4 MiB VMEM total,
    # well under v7x's 32 MiB scoped limit and v5e's 16 MiB default.
    target_block_bytes = 1 << 20
    r_target = max(8, (target_block_bytes // (lane_w * 4)) // 8 * 8)
    if rows <= r_target:
        r_block = rows          # full-extent block: always a legal block shape
    else:
        r_block = r_target      # multiple of 8; last partial block is clipped
    grid = (pl.cdiv(rows, r_block),)

    out = pl.pallas_call(
        _laplace_density_kernel,
        out_shape=jax.ShapeDtypeStruct((rows, lane_w), orig_dtype),
        grid_spec=pltpu.PrefetchScalarGridSpec(
            num_scalar_prefetch=0,
            grid=grid,
            in_specs=[
                pl.BlockSpec(memory_space=pltpu.MemorySpace.SMEM),   # scalars
                pl.BlockSpec((r_block, lane_w), lambda i: (i, 0)),   # sdf tile
            ],
            out_specs=pl.BlockSpec((r_block, lane_w), lambda i: (i, 0)),
        ),
        compiler_params=pltpu.CompilerParams(
            # parallel grid axis -> shards across v7x's 2 TensorCores
            dimension_semantics=("parallel",),
        ),
    )(params, slab)

    out_flat = out.reshape(-1)
    if pad:
        out_flat = out_flat[:n]
    return out_flat.reshape(orig_shape)


def laplace_density_ref(sdf, beta_param, beta_min=1e-4, beta=None):
    if beta is None:
        beta = jnp.abs(beta_param) + beta_min
    alpha = 1.0 / beta
    return alpha * (0.5 + 0.5 * jnp.sign(sdf) * jnp.expm1(-jnp.abs(sdf) / beta))


if __name__ == "__main__":
    key = jax.random.PRNGKey(0)
    # sdf samples: (rays, samples) SDF values, small shape
    sdf = jax.random.normal(key, (2, 512), dtype=jnp.float32) * 0.5
    # deterministic parameter init, mirroring params_init={'beta': 0.1}
    beta_param = jnp.asarray(0.1, jnp.float32)

    out = laplace_density(sdf, beta_param)
    out = jax.block_until_ready(out)
    ref = laplace_density_ref(sdf, beta_param)
    assert out.shape == sdf.shape and out.dtype == sdf.dtype
    assert jnp.allclose(out, ref, rtol=1e-5, atol=1e-5), "mismatch vs reference"

    # ragged shape exercises the pad/slice fallback path
    sdf2 = jax.random.normal(jax.random.PRNGKey(1), (7, 37), dtype=jnp.float32)
    out2 = jax.block_until_ready(laplace_density(sdf2, beta_param))
    ref2 = laplace_density_ref(sdf2, beta_param)
    assert out2.shape == sdf2.shape
    assert jnp.allclose(out2, ref2, rtol=1e-5, atol=1e-5), "mismatch (ragged)"

    print("KERNEL_OK")
</pallas_src>

<mosaic_0001>
module attributes {stable_mosaic.version = 11 : i64} {
  func.func @_laplace_density_kernel(%arg0: i32, %arg1: memref<1x3xf32, #tpu.memory_space<smem>>, %arg2: memref<1x1024xf32, #tpu.memory_space<vmem>>, %arg3: memref<1x1024xf32, #tpu.memory_space<vmem>>) attributes {dimension_semantics = [#tpu.dimension_semantics<parallel>], iteration_bounds = array<i64: 1>, scalar_prefetch = 0 : i64, scratch_operands = 0 : i64, tpu.core_type = #tpu.core_type<tc>, window_params = [{transform_indices = @transform_0, window_bounds = array<i64: 1, 3>}, {transform_indices = @transform_1, window_bounds = array<i64: 1, 1024>}, {transform_indices = @transform_2, window_bounds = array<i64: 1, 1024>}]} {
    %c0 = arith.constant 0 : index
    %c0_0 = arith.constant 0 : index
    %0 = memref.load %arg1[%c0, %c0_0] : memref<1x3xf32, #tpu.memory_space<smem>>
    %c0_1 = arith.constant 0 : index
    %c1 = arith.constant 1 : index
    %1 = memref.load %arg1[%c0_1, %c1] : memref<1x3xf32, #tpu.memory_space<smem>>
    %c0_2 = arith.constant 0 : index
    %c2 = arith.constant 2 : index
    %2 = memref.load %arg1[%c0_2, %c2] : memref<1x3xf32, #tpu.memory_space<smem>>
    %c0_3 = arith.constant 0 : index
    %c0_4 = arith.constant 0 : index
    %3 = vector.load %arg2[%c0_3, %c0_4] : memref<1x1024xf32, #tpu.memory_space<vmem>>, vector<1x1024xf32>
    %4 = math.absf %3 : vector<1x1024xf32>
    %cst = arith.constant 0.000000e+00 : f32
    %5 = vector.broadcast %cst : f32 to vector<1x1024xf32>
    %6 = arith.subf %5, %4 : vector<1x1024xf32>
    %7 = vector.broadcast %0 : f32 to vector<1x1024xf32>
    %8 = arith.mulf %6, %7 : vector<1x1024xf32>
    %9 = math.exp %8 : vector<1x1024xf32>
    %cst_5 = arith.constant 0.000000e+00 : f32
    %10 = vector.broadcast %cst_5 : f32 to vector<1x1024xf32>
    %11 = arith.cmpf oge, %3, %10 : vector<1x1024xf32>
    %12 = vector.broadcast %1 : f32 to vector<1x1024xf32>
    %13 = arith.mulf %12, %9 : vector<1x1024xf32>
    %14 = vector.broadcast %1 : f32 to vector<1x1024xf32>
    %15 = arith.mulf %14, %9 : vector<1x1024xf32>
    %16 = vector.broadcast %2 : f32 to vector<1x1024xf32>
    %17 = arith.subf %16, %15 : vector<1x1024xf32>
    %18 = arith.select %11, %13, %17 : vector<1x1024xi1>, vector<1x1024xf32>
    %c0_6 = arith.constant 0 : index
    %c0_7 = arith.constant 0 : index
    %19 = vector.load %arg3[%c0_6, %c0_7] : memref<1x1024xf32, #tpu.memory_space<vmem>>, vector<1x1024xf32>
    tpu.vector_store %arg3[%c0_6, %c0_7], %18 {strides = array<i32>} : memref<1x1024xf32, #tpu.memory_space<vmem>>, vector<1x1024xf32>,
    return
  }
  func.func @transform_0(%arg0: i32) -> (i32, i32) {
    %c0_i32 = arith.constant 0 : i32
    %c0_i32_0 = arith.constant 0 : i32
    %c0_i32_1 = arith.constant 0 : i32
    return %c0_i32, %c0_i32_0 : i32, i32
  }
  func.func @transform_1(%arg0: i32) -> (i32, i32) {
    %c0_i32 = arith.constant 0 : i32
    %c0_i32_0 = arith.constant 0 : i32
    return %arg0, %c0_i32 : i32, i32
  }
  func.func @transform_2(%arg0: i32) -> (i32, i32) {
    %c0_i32 = arith.constant 0 : i32
    %c0_i32_0 = arith.constant 0 : i32
    return %arg0, %c0_i32 : i32, i32
  }
}

</mosaic_0001>

<llo_original>
// kernel: tpu_custom_call.1
$region0: #{tpu_custom_call.1}
  #allocation0 [shape = 'u32[]', space=smem, size = 0x4, offset = 0x4, fixed_abs, tag = 'smem constant byte address 0x4 - core index']
  #allocation1 [shape = 'u32[144,128]{1,0:T(1,128)}', space=vmem, size = 0x12000, scoped, tag = 'internal scratch']
  %s0 = inlined_call_operand.hbm [shape: f32[1,3], index: 0, kind: input, shape index: {}]
  %s1 = inlined_call_operand.hbm [shape: f32[1,1024], index: 1, kind: input, shape index: {}]
  %s2 = inlined_call_operand.hbm [shape: f32[1,1024], index: 2, kind: output, shape index: {}]
  %s3 = sld [smem:[#allocation0]]
  $region26: #{tpu_custom_call.1} parent=0
    _
  %s5 = ssub.s32 1, %s3
  %s6 = scalar_select 0, %s5, %s3
  $region1: #{tpu_custom_call.1} parent=0
    #allocation2 [shape = 'u8[512]{0}', space=smem, size = 0x200, scoped, tag = 'input window, operand 0, single buffered']
    #allocation3 [shape = 's32[1]{0}', space=sflag, size = 0x4, scoped, tag = 'scoped memory for tpu_custom_call.1']
    #allocation4 [shape = 's32[1]{0}', space=sflag, size = 0x4, scoped, tag = 'scoped memory for tpu_custom_call.1']
    #allocation5 [shape = 's32[1]{0}', space=sflag, size = 0x4, scoped, tag = 'scoped memory for tpu_custom_call.1']
    #allocation6 [shape = 'u8[4096]{0}', space=vmem, size = 0x1000, scoped, tag = 'input window, operand 1, single buffered']
    #allocation7 [shape = 'u8[4096]{0}', space=vmem, size = 0x1000, scoped, tag = 'output window, operand 0, single buffered']
    %7 = vsyncpa [#allocation5], 0
    %8 = vsyncpa [#allocation3], 0
    %9 = vsyncpa [#allocation4], 0
    // Predicated region
    $region2: #{tpu_custom_call.1} parent=1 // pred_check
      _
    $region3: #{tpu_custom_call.1} parent=1 // pred_check_branch
      %11 = sbr.rel (0) target = $region5
    $region4: #{tpu_custom_call.1} parent=1 // pred_region
      %s13 = ssub.s32 16, 16
      %14 = vsyncadd [#allocation5], %s13
      %17 = dma.hbm_to_smem %s0, 16, [#allocation2], [#allocation5]
    $region5: #{tpu_custom_call.1} parent=1 // pred_fallthru
      _
    // Predicated region
    $region6: #{tpu_custom_call.1} parent=1 // pred_check
      _
    $region7: #{tpu_custom_call.1} parent=1 // pred_check_branch
      %19 = sbr.rel (0) target = $region9
    $region8: #{tpu_custom_call.1} parent=1 // pred_region
      %s21 = ssub.s32 128, 128
      %22 = vsyncadd [#allocation3], %s21
      %s24 = sshll.u32 [#allocation6], 4
      %s25 = int_to_ptr.vmem [resolvable:$true] %s24
      %27 = dma.hbm_to_vmem [thread:$0]  %s1, 128, %s25, [#allocation3]
    $region9: #{tpu_custom_call.1} parent=1 // pred_fallthru
      _
    // Predicated region
    $region10: #{tpu_custom_call.1} parent=1 // pred_check
      _
    $region11: #{tpu_custom_call.1} parent=1 // pred_check_branch
      %29 = sbr.rel (0) target = $region13
    $region12: #{tpu_custom_call.1} parent=1 // pred_region
      %30 = dma.done [#allocation5], 16
    $region13: #{tpu_custom_call.1} parent=1 // pred_fallthru
      _
    // Predicated region
    $region14: #{tpu_custom_call.1} parent=1 // pred_check
      _
    $region15: #{tpu_custom_call.1} parent=1 // pred_check_branch
      %32 = sbr.rel (0) target = $region17
    $region16: #{tpu_custom_call.1} parent=1 // pred_region
      %33 = dma.done [#allocation3], 128
    $region17: #{tpu_custom_call.1} parent=1 // pred_fallthru
      _
    %34 = sfence
    %s35 = sld [smem:[#allocation2]]
    %s36 = sld [smem:[#allocation2 + $0x1]]
    %s37 = sld [smem:[#allocation2 + $0x2]]
    %v38 = vld [vmem:[#allocation6] sm:$0xff]
    %v39 = vand.u32 2147483647, %v38
    %v40 = vsub.f32 0.0, %v39
    %v41 = vstv %s35
    %v42 = vmul.f32 %v40, %v41
    %v43 = vmul.f32 %v42, 1.442695
    %v44 = vpow.pop %v43
    %vm45 = vcmp.ge.f32.partialorder %v38, 0.0
    %v46 = vstv %s36
    %v47 = vmul.f32 %v46, %v44
    %v48 = vstv %s37
    %v49 = vsub.f32 %v48, %v47
    %v50 = vsel %vm45, %v47, %v49
    %51 = vst [vmem:[#allocation7] sm:$0xff] %v50
    // Predicated region
    $region18: #{tpu_custom_call.1} parent=1 // pred_check
      _
    $region19: #{tpu_custom_call.1} parent=1 // pred_check_branch
      %53 = sbr.rel (0) target = $region21
    $region20: #{tpu_custom_call.1} parent=1 // pred_region
      %s55 = ssub.s32 128, 128
      %56 = vsyncadd [#allocation4], %s55
      %s58 = sshll.u32 [#allocation7], 4
      %s59 = int_to_ptr.vmem [resolvable:$true] %s58
      %61 = dma.vmem_to_hbm [thread:$0]  %s59, 128, %s2, [#allocation4]
    $region21: #{tpu_custom_call.1} parent=1 // pred_fallthru
      _
    // Predicated region
    $region22: #{tpu_custom_call.1} parent=1 // pred_check
      _
    $region23: #{tpu_custom_call.1} parent=1 // pred_check_branch
      %63 = sbr.rel (0) target = $region25
    $region24: #{tpu_custom_call.1} parent=1 // pred_region
      %64 = dma.done [#allocation4], 128
    $region25: #{tpu_custom_call.1} parent=1 // pred_fallthru
      _
    %65 = vsyncpa [#allocation3], 1
    %66 = vsyncpa [#allocation4], 1
    %67 = vsyncpa [#allocation5], 1

</llo_original>
